<compile_context>
chip_gen: v5e
topology: v5e:2x2
jax: 0.10.0
libtpu: 0.0.40
codegen_flags: <defaults>
</compile_context>

<pallas_src>
import jax
import jax.numpy as jnp
from jax import lax
from jax.experimental import pallas as pl
from jax.experimental.pallas import tpu as pltpu


def _spatial_attention_kernel(x_ref, w_ref, out_ref, attn_ref=None):
    """One grid step over a (bt, C, L) batch tile in the native layout.

    x_ref    : (bt, C, L)  activations (caller dtype, f32 or bf16)
    w_ref    : (3, C, C)   conv taps; tap k multiplies x[l-1+k]
    out_ref  : (bt, C, L)  x * sigmoid(conv(x))
    attn_ref : (bt, C, L)  sigmoid(conv(x))   (optional second output)
    """
    bt, _, L = x_ref.shape

    # Lane-position boundary masks, hoisted: computed once per grid step.
    pos = lax.broadcasted_iota(jnp.int32, x_ref.shape[1:], 1)   # (C, L)
    first = pos == 0
    last = pos == (L - 1)

    # Loop-invariant tap weights (hoisted out of the batch loop).
    w_prev = w_ref[0]
    w_mid = w_ref[1]
    w_next = w_ref[2]

    @pl.loop(0, bt)
    def _(b):
        xb = x_ref[b]                                           # (C, L)
        # Conv1d zero padding: values rotated around the row edge land exactly
        # on the masked boundary lanes.  pltpu.roll only takes non-negative
        # shifts, so the "+1" shift is expressed as L-1.
        x_prev = jnp.where(first, 0.0, pltpu.roll(xb, shift=1, axis=1))
        x_next = jnp.where(last, 0.0, pltpu.roll(xb, shift=L - 1, axis=1))

        # Three accumulated MXU matmuls with f32 accumulation (no tap-concat
        # scratch, no extra VMEM slab stores).
        s = jnp.dot(w_prev, x_prev, preferred_element_type=jnp.float32)
        s = s + jnp.dot(w_mid, xb, preferred_element_type=jnp.float32)
        s = s + jnp.dot(w_next, x_next, preferred_element_type=jnp.float32)

        attn = jax.nn.sigmoid(s)                                # f32 (EUP)
        out_ref[b] = (xb * attn).astype(out_ref.dtype)
        if attn_ref is not None:
            attn_ref[b] = attn.astype(attn_ref.dtype)


def _vmem_capacity_bytes():
    """Physical VMEM per core; conservative default if the query fails."""
    try:
        cap = getattr(pltpu.get_tpu_info(), "vmem_capacity_bytes", None)
        if cap:
            return int(cap)
    except Exception:
        pass
    return 64 << 20   # v7x has the smallest physical VMEM (64 MiB)


def _pick_batch_tile(batch, channels, seq_len, itemsize, vmem_budget_bytes):
    """Largest divisor of `batch` whose per-step working set fits the budget.

    Working set per step ~= 3 blocks (x, out, attn), double-buffered, + small
    f32 temporaries.  The tile is additionally capped at batch // 2 (when
    batch >= 2) so the grid always has >= 2 steps and v7x's two TensorCores
    both get work; this costs nothing on single-TC v5e/v6e.
    """
    def footprint(bt):
        blocks = 3 * bt * channels * seq_len * itemsize * 2    # double-buffered
        temps = 8 * channels * seq_len * 4                     # f32 temporaries
        return blocks + temps

    max_bt = batch if batch < 2 else max(1, batch // 2)
    best = 1
    for bt in range(1, max_bt + 1):
        if batch % bt == 0 and footprint(bt) <= vmem_budget_bytes:
            best = bt
    return best


def spatial_attention_forward(x, weight, *, batch_tile=None,
                              return_attention=True):
    """x: (B, C, L); weight: (C, C, 3) in PyTorch Conv1d (out, in, k) layout.

    Returns (x * attention, attention), each (B, C, L) in x.dtype, or just the
    gated output when return_attention=False (saves one HBM write).
    """
    B, C, L = x.shape
    assert weight.shape == (C, C, 3)

    itemsize = jnp.dtype(x.dtype).itemsize
    vmem_cap = _vmem_capacity_bytes()
    # Per-step working-set budget: ~cap/4, clamped to [8, 32] MiB
    # (~16 MiB on v7x's 64 MiB VMEM, 32 MiB on v5e/v6e's 128 MiB).
    vmem_budget = max(8 << 20, min(32 << 20, vmem_cap // 4))

    if batch_tile is None:
        batch_tile = _pick_batch_tile(B, C, L, itemsize, vmem_budget)
    assert B % batch_tile == 0, "batch_tile must divide the batch dimension"
    num_tiles = B // batch_tile

    # Tiny weight relayout (C, C, 3) -> (3, C, C) so each tap is a clean tile;
    # cast to the activation dtype so the MXU sees matching operand dtypes.
    w3 = jnp.transpose(weight, (2, 0, 1)).astype(x.dtype)

    # TODO(synk): for large C, pad C to the sublane multiple (8 f32 / 16 bf16)
    # for denser vregs/MXU; skipped here since padding x would add an HBM copy.
    blk = pl.BlockSpec((batch_tile, C, L), lambda i: (i, 0, 0))
    out_specs = [blk]
    out_shape = [jax.ShapeDtypeStruct((B, C, L), x.dtype)]
    if return_attention:
        out_specs.append(blk)
        out_shape.append(jax.ShapeDtypeStruct((B, C, L), x.dtype))

    outs = pl.pallas_call(
        _spatial_attention_kernel,
        grid=(num_tiles,),
        in_specs=[
            blk,                                            # activations
            pl.BlockSpec((3, C, C), lambda i: (0, 0, 0)),   # conv taps
        ],
        out_specs=out_specs,
        out_shape=out_shape,
        compiler_params=pltpu.CompilerParams(
            dimension_semantics=("parallel",),
            vmem_limit_bytes=int(min(vmem_cap * 3 // 4, 96 << 20)),
        ),
    )(x, w3)

    if return_attention:
        return outs[0], outs[1]
    return outs[0]


def _reference(x, weight):
    """Pure-JAX reference matching the PyTorch SpatialAttention.forward."""
    dn = ("NCH", "OIH", "NCH")
    s = lax.conv_general_dilated(x.astype(jnp.float32),
                                 weight.astype(jnp.float32),
                                 window_strides=(1,), padding=[(1, 1)],
                                 dimension_numbers=dn)
    attn = jax.nn.sigmoid(s)
    return x.astype(jnp.float32) * attn, attn


if __name__ == "__main__":
    B, C, L = 2, 4, 16

    key = jax.random.PRNGKey(0)
    kx, kw = jax.random.split(key)
    x = jax.random.normal(kx, (B, C, L), jnp.float32)
    weight = 0.3 * jax.random.normal(kw, (C, C, 3), jnp.float32)

    # f32 path
    out, attn = spatial_attention_forward(x, weight)
    out = jax.block_until_ready(out)
    attn = jax.block_until_ready(attn)
    out_ref, attn_ref = _reference(x, weight)
    assert jnp.allclose(out, out_ref, atol=1e-4, rtol=1e-4), "output mismatch"
    assert jnp.allclose(attn, attn_ref, atol=1e-4, rtol=1e-4), "attention mismatch"

    # bf16 I/O path (halves HBM traffic on this bandwidth-bound op)
    x_bf16 = x.astype(jnp.bfloat16)
    out_b, attn_b = spatial_attention_forward(x_bf16, weight)
    out_b = jax.block_until_ready(out_b)
    w_bf16 = weight.astype(jnp.bfloat16).astype(jnp.float32)
    out_ref_b, _ = _reference(x_bf16.astype(jnp.float32), w_bf16)
    assert jnp.allclose(out_b.astype(jnp.float32), out_ref_b,
                        atol=6e-2, rtol=6e-2), "bf16 output mismatch"

    print("KERNEL_OK")
</pallas_src>

<mosaic_0001>
module attributes {stable_mosaic.version = 11 : i64} {
  func.func @_spatial_attention_kernel(%arg0: i32, %arg1: memref<1x4x16xf32, #tpu.memory_space<vmem>>, %arg2: memref<3x4x4xf32, #tpu.memory_space<vmem>>, %arg3: memref<1x4x16xf32, #tpu.memory_space<vmem>>, %arg4: memref<1x4x16xf32, #tpu.memory_space<vmem>>) attributes {dimension_semantics = [#tpu.dimension_semantics<parallel>], iteration_bounds = array<i64: 2>, scalar_prefetch = 0 : i64, scratch_operands = 0 : i64, tpu.core_type = #tpu.core_type<tc>, window_params = [{transform_indices = @transform_0, window_bounds = array<i64: 1, 4, 16>}, {pipeline_mode = #tpu.pipeline_mode<synchronous>, transform_indices = @transform_1, window_bounds = array<i64: 3, 4, 4>}, {transform_indices = @transform_2, window_bounds = array<i64: 1, 4, 16>}, {transform_indices = @transform_3, window_bounds = array<i64: 1, 4, 16>}]} {
    %0 = tpu.iota {dimensions = array<i32: 1>} : vector<4x16xi32>
    %c0_i32 = arith.constant 0 : i32
    %1 = vector.broadcast %c0_i32 : i32 to vector<4x16xi32>
    %2 = arith.cmpi eq, %0, %1 : vector<4x16xi32>
    %c15_i32 = arith.constant 15 : i32
    %3 = vector.broadcast %c15_i32 : i32 to vector<4x16xi32>
    %4 = arith.cmpi eq, %0, %3 : vector<4x16xi32>
    %c0 = arith.constant 0 : index
    %c0_0 = arith.constant 0 : index
    %c0_1 = arith.constant 0 : index
    %5 = vector.load %arg2[%c0, %c0_0, %c0_1] : memref<3x4x4xf32, #tpu.memory_space<vmem>>, vector<1x4x4xf32>
    %6 = vector.shape_cast %5 : vector<1x4x4xf32> to vector<4x4xf32>
    %c1 = arith.constant 1 : index
    %c0_2 = arith.constant 0 : index
    %c0_3 = arith.constant 0 : index
    %7 = vector.load %arg2[%c1, %c0_2, %c0_3] : memref<3x4x4xf32, #tpu.memory_space<vmem>>, vector<1x4x4xf32>
    %8 = vector.shape_cast %7 : vector<1x4x4xf32> to vector<4x4xf32>
    %c2 = arith.constant 2 : index
    %c0_4 = arith.constant 0 : index
    %c0_5 = arith.constant 0 : index
    %9 = vector.load %arg2[%c2, %c0_4, %c0_5] : memref<3x4x4xf32, #tpu.memory_space<vmem>>, vector<1x4x4xf32>
    %10 = vector.shape_cast %9 : vector<1x4x4xf32> to vector<4x4xf32>
    %c0_i32_6 = arith.constant 0 : i32
    %c1_i32 = arith.constant 1 : i32
    %11 = arith.muli %c0_i32_6, %c1_i32 : i32
    %c0_i32_7 = arith.constant 0 : i32
    %12 = arith.addi %c0_i32_7, %11 : i32
    %13 = arith.index_cast %12 : i32 to index
    %c0_8 = arith.constant 0 : index
    %c0_9 = arith.constant 0 : index
    %14 = vector.load %arg1[%13, %c0_8, %c0_9] : memref<1x4x16xf32, #tpu.memory_space<vmem>>, vector<1x4x16xf32>
    %15 = vector.shape_cast %14 : vector<1x4x16xf32> to vector<4x16xf32>
    %c1_i32_10 = arith.constant 1 : i32
    %16 = tpu.dynamic_rotate %15 by %c1_i32_10 dim 1 : vector<4x16xf32>, i32 -> vector<4x16xf32>
    %cst = arith.constant 0.000000e+00 : f32
    %17 = vector.broadcast %cst : f32 to vector<4x16xf32>
    %18 = arith.select %2, %17, %16 : vector<4x16xi1>, vector<4x16xf32>
    %c15_i32_11 = arith.constant 15 : i32
    %19 = tpu.dynamic_rotate %15 by %c15_i32_11 dim 1 : vector<4x16xf32>, i32 -> vector<4x16xf32>
    %cst_12 = arith.constant 0.000000e+00 : f32
    %20 = vector.broadcast %cst_12 : f32 to vector<4x16xf32>
    %21 = arith.select %4, %20, %19 : vector<4x16xi1>, vector<4x16xf32>
    %cst_13 = arith.constant dense<0.000000e+00> : vector<4x16xf32>
    %22 = tpu.matmul %6, %18, %cst_13 {dimension_numbers = #tpu.dot_dimension_numbers<[1], [0], [0], [1], [0, 0, 1, 1], [], []>} : vector<4x4xf32>, vector<4x16xf32>, vector<4x16xf32> -> vector<4x16xf32>
    %cst_14 = arith.constant dense<0.000000e+00> : vector<4x16xf32>
    %23 = tpu.matmul %8, %15, %cst_14 {dimension_numbers = #tpu.dot_dimension_numbers<[1], [0], [0], [1], [0, 0, 1, 1], [], []>} : vector<4x4xf32>, vector<4x16xf32>, vector<4x16xf32> -> vector<4x16xf32>
    %24 = arith.addf %22, %23 : vector<4x16xf32>
    %cst_15 = arith.constant dense<0.000000e+00> : vector<4x16xf32>
    %25 = tpu.matmul %10, %21, %cst_15 {dimension_numbers = #tpu.dot_dimension_numbers<[1], [0], [0], [1], [0, 0, 1, 1], [], []>} : vector<4x4xf32>, vector<4x16xf32>, vector<4x16xf32> -> vector<4x16xf32>
    %26 = arith.addf %24, %25 : vector<4x16xf32>
    %27 = arith.negf %26 : vector<4x16xf32>
    %28 = math.exp %27 : vector<4x16xf32>
    %cst_16 = arith.constant 1.000000e+00 : f32
    %29 = vector.broadcast %cst_16 : f32 to vector<4x16xf32>
    %30 = arith.addf %29, %28 : vector<4x16xf32>
    %31 = arith.divf %29, %30 : vector<4x16xf32>
    %32 = arith.mulf %15, %31 : vector<4x16xf32>
    %33 = arith.index_cast %12 : i32 to index
    %c0_17 = arith.constant 0 : index
    %c0_18 = arith.constant 0 : index
    %34 = vector.load %arg3[%33, %c0_17, %c0_18] : memref<1x4x16xf32, #tpu.memory_space<vmem>>, vector<1x4x16xf32>
    %35 = vector.shape_cast %34 : vector<1x4x16xf32> to vector<4x16xf32>
    %36 = vector.shape_cast %32 : vector<4x16xf32> to vector<1x4x16xf32>
    tpu.vector_store %arg3[%33, %c0_17, %c0_18], %36 {strides = array<i32>} : memref<1x4x16xf32, #tpu.memory_space<vmem>>, vector<1x4x16xf32>,
    %37 = arith.index_cast %12 : i32 to index
    %c0_19 = arith.constant 0 : index
    %c0_20 = arith.constant 0 : index
    %38 = vector.load %arg4[%37, %c0_19, %c0_20] : memref<1x4x16xf32, #tpu.memory_space<vmem>>, vector<1x4x16xf32>
    %39 = vector.shape_cast %38 : vector<1x4x16xf32> to vector<4x16xf32>
    %40 = vector.shape_cast %31 : vector<4x16xf32> to vector<1x4x16xf32>
    tpu.vector_store %arg4[%37, %c0_19, %c0_20], %40 {strides = array<i32>} : memref<1x4x16xf32, #tpu.memory_space<vmem>>, vector<1x4x16xf32>,
    %c1_i32_21 = arith.constant 1 : i32
    return
  }
  func.func @transform_0(%arg0: i32) -> (i32, i32, i32) {
    %c0_i32 = arith.constant 0 : i32
    %c0_i32_0 = arith.constant 0 : i32
    %c0_i32_1 = arith.constant 0 : i32
    return %arg0, %c0_i32, %c0_i32_0 : i32, i32, i32
  }
  func.func @transform_1(%arg0: i32) -> (i32, i32, i32) {
    %c0_i32 = arith.constant 0 : i32
    %c0_i32_0 = arith.constant 0 : i32
    %c0_i32_1 = arith.constant 0 : i32
    %c0_i32_2 = arith.constant 0 : i32
    return %c0_i32, %c0_i32_0, %c0_i32_1 : i32, i32, i32
  }
  func.func @transform_2(%arg0: i32) -> (i32, i32, i32) {
    %c0_i32 = arith.constant 0 : i32
    %c0_i32_0 = arith.constant 0 : i32
    %c0_i32_1 = arith.constant 0 : i32
    return %arg0, %c0_i32, %c0_i32_0 : i32, i32, i32
  }
  func.func @transform_3(%arg0: i32) -> (i32, i32, i32) {
    %c0_i32 = arith.constant 0 : i32
    %c0_i32_0 = arith.constant 0 : i32
    %c0_i32_1 = arith.constant 0 : i32
    return %arg0, %c0_i32, %c0_i32_0 : i32, i32, i32
  }
}

</mosaic_0001>

<llo_original>
// kernel: tpu_custom_call.1
$region0: #{tpu_custom_call.1}
  #allocation0 [shape = 'u32[]', space=smem, size = 0x4, offset = 0x4, fixed_abs, tag = 'smem constant byte address 0x4 - core index']
  #allocation1 [shape = 'u32[72,128]{1,0:T(1,128)}', space=vmem, size = 0x9000, scoped, tag = 'internal scratch']
  %s0 = inlined_call_operand.hbm [shape: f32[2,4,16], index: 0, kind: input, shape index: {}]
  %s1 = inlined_call_operand.hbm [shape: f32[3,4,4], index: 1, kind: input, shape index: {}]
  %s2 = inlined_call_operand.hbm [shape: f32[2,4,16], index: 2, kind: output, shape index: {0}]
  %s3 = inlined_call_operand.hbm [shape: f32[2,4,16], index: 3, kind: output, shape index: {1}]
  %4 = xla_tuple %s2, %s3
  %s5 = sld [smem:[#allocation0]]
  $region57: #{tpu_custom_call.1} parent=0
    _
  %s7 = ssub.s32 1, %s5
  %s8 = scalar_select 0, %s7, %s5
  $region1: #{tpu_custom_call.1} parent=0
    #allocation2 [shape = 'u8[4096]{0}', space=vmem, size = 0x1000, scoped, tag = 'input window, operand 0']
    #allocation3 [shape = 's32[2]{0}', space=sflag, size = 0x8, scoped, tag = 'scoped memory for tpu_custom_call.1']
    #allocation4 [shape = 's32[2]{0}', space=sflag, size = 0x8, scoped, tag = 'scoped memory for tpu_custom_call.1']
    #allocation5 [shape = 'u8[6144]{0}', space=vmem, size = 0x1800, scoped, tag = 'input window, operand 1, single buffered']
    #allocation6 [shape = 's32[1]{0}', space=sflag, size = 0x4, scoped, tag = 'scoped memory for tpu_custom_call.1']
    #allocation7 [shape = 'u8[4096]{0}', space=vmem, size = 0x1000, scoped, tag = 'output window, operand 0']
    #allocation8 [shape = 'u8[4096]{0}', space=vmem, size = 0x1000, scoped, tag = 'output window, operand 1']
    #allocation9 [shape = 's32[2]{0}', space=sflag, size = 0x8, scoped, tag = 'scoped memory for tpu_custom_call.1']
    %9 = vsyncpa [#allocation3], 0
    %s10 = scalar_lea.sflag [#allocation3], 1
    %11 = vsyncpa %s10, 0
    %12 = vsyncpa [#allocation6], 0
    %13 = vsyncpa [#allocation4], 0
    %s14 = scalar_lea.sflag [#allocation4], 1
    %15 = vsyncpa %s14, 0
    %16 = vsyncpa [#allocation9], 0
    %s17 = scalar_lea.sflag [#allocation9], 1
    %18 = vsyncpa %s17, 0
    loop: start=0, step=1, limit=4
    $region2: #{tpu_custom_call.1} parent=1 // loop_pre_header
      _
    $region3: #{tpu_custom_call.1} parent=1 // loop_header
      %s20 = sphi 0, %s24
      %p21 = scmp.ge.s32.totalorder %s20, 4
      %s30 = sphi 0, %s32
      %s33 = sphi 0, %s30
      %s34 = sphi 0, %s33
      %s50 = sphi 0, %s34
      %s54 = sphi 0, %s54
      %s56 = sphi 0, %s54
      %s57 = sphi 0, %s56
      %s71 = sphi 0, %s57
      %s77 = sphi 0, %s79
      %s80 = sphi 0, %s77
      %s81 = sphi 0, %s80
      %s97 = sphi 0, %s81
      %s103 = sphi 0, %s105
      %s106 = sphi 0, %s103
      %s107 = sphi 0, %s106
      %s123 = sphi 0, %s107
    $region4: #{tpu_custom_call.1} parent=1 // loop_header_branch
      %23 = sbr.rel (%p21) target = $region8
    $region5: #{tpu_custom_call.1} parent=1 // loop_body
      %s25 = ssub.s32 %s20, 1
      %s26 = ssub.s32 %s20, 2
      %s27 = sadd.s32 %s20, 1
      %s28 = ssub.s32 %s20, %s27
      %p29 = scmp.eq.s32.totalorder %s28, 0
      %s31 = sadd.s32 %s30, 1
      %s32 = scalar_select %p29, %s30, %s31
      %p35 = pneg %p29
      %p36 = scmp.eq.s32.totalorder %s20, 1
      %p37 = por %p35, %p36
      %p38 = scmp.ne.s32.totalorder %s30, %s33
      %p39 = scmp.eq.s32.totalorder %s20, 0
      %p40 = por %p38, %p39
      %p41 = scmp.ne.s32.totalorder %s30, %s33
      %p42 = scmp.eq.s32.totalorder %s25, 1
      %p43 = por %p41, %p42
      %p44 = scmp.ne.s32.totalorder %s33, %s34
      %p45 = scmp.eq.s32.totalorder %s25, 0
      %p46 = por %p44, %p45
      %p47 = scmp.ne.s32.totalorder %s33, %s34
      %p48 = scmp.eq.s32.totalorder %s26, 1
      %p49 = por %p47, %p48
      %p51 = scmp.ne.s32.totalorder %s34, %s50
      %p52 = scmp.eq.s32.totalorder %s26, 0
      %p53 = por %p51, %p52
      %s55 = sadd.s32 %s54, 1
      %p58 = scmp.eq.s32.totalorder %s20, 1
      %p59 = scmp.ne.s32.totalorder %s54, %s56
      %p60 = scmp.eq.s32.totalorder %s20, 0
      %p61 = por %p59, %p60
      %p62 = scmp.ne.s32.totalorder %s54, %s56
      %p63 = scmp.eq.s32.totalorder %s25, 1
      %p64 = por %p62, %p63
      %p65 = scmp.ne.s32.totalorder %s56, %s57
      %p66 = scmp.eq.s32.totalorder %s25, 0
      %p67 = por %p65, %p66
      %p68 = scmp.ne.s32.totalorder %s56, %s57
      %p69 = scmp.eq.s32.totalorder %s26, 1
      %p70 = por %p68, %p69
      %p72 = scmp.ne.s32.totalorder %s57, %s71
      %p73 = scmp.eq.s32.totalorder %s26, 0
      %p74 = por %p72, %p73
      %s75 = ssub.s32 %s20, %s27
      %p76 = scmp.eq.s32.totalorder %s75, 0
      %s78 = sadd.s32 %s77, 1
      %s79 = scalar_select %p76, %s77, %s78
      %p82 = pneg %p76
      %p83 = scmp.eq.s32.totalorder %s20, 1
      %p84 = por %p82, %p83
      %p85 = scmp.ne.s32.totalorder %s77, %s80
      %p86 = scmp.eq.s32.totalorder %s20, 0
      %p87 = por %p85, %p86
      %p88 = scmp.ne.s32.totalorder %s77, %s80
      %p89 = scmp.eq.s32.totalorder %s25, 1
      %p90 = por %p88, %p89
      %p91 = scmp.ne.s32.totalorder %s80, %s81
      %p92 = scmp.eq.s32.totalorder %s25, 0
      %p93 = por %p91, %p92
      %p94 = scmp.ne.s32.totalorder %s80, %s81
      %p95 = scmp.eq.s32.totalorder %s26, 1
      %p96 = por %p94, %p95
      %p98 = scmp.ne.s32.totalorder %s81, %s97
      %p99 = scmp.eq.s32.totalorder %s26, 0
      %p100 = por %p98, %p99
      %s101 = ssub.s32 %s20, %s27
      %p102 = scmp.eq.s32.totalorder %s101, 0
      %s104 = sadd.s32 %s103, 1
      %s105 = scalar_select %p102, %s103, %s104
      %p108 = pneg %p102
      %p109 = scmp.eq.s32.totalorder %s20, 1
      %p110 = por %p108, %p109
      %p111 = scmp.ne.s32.totalorder %s103, %s106
      %p112 = scmp.eq.s32.totalorder %s20, 0
      %p113 = por %p111, %p112
      %p114 = scmp.ne.s32.totalorder %s103, %s106
      %p115 = scmp.eq.s32.totalorder %s25, 1
      %p116 = por %p114, %p115
      %p117 = scmp.ne.s32.totalorder %s106, %s107
      %p118 = scmp.eq.s32.totalorder %s25, 0
      %p119 = por %p117, %p118
      %p120 = scmp.ne.s32.totalorder %s106, %s107
      %p121 = scmp.eq.s32.totalorder %s26, 1
      %p122 = por %p120, %p121
      %p124 = scmp.ne.s32.totalorder %s107, %s123
      %p125 = scmp.eq.s32.totalorder %s26, 0
      %p126 = por %p124, %p125
      %p127 = scmp.le.s32.totalorder 1, %s20
      %p128 = scmp.lt.s32.totalorder %s20, 3
      %p129 = pnand %p127, %p128
      %p130 = pneg %p129
      // Predicated region
      $region9: #{tpu_custom_call.1} parent=5 // pred_check
        _
      $region10: #{tpu_custom_call.1} parent=5 // pred_check_branch
        %132 = sbr.rel (%p129) target = $region12
      $region11: #{tpu_custom_call.1} parent=5 // pred_region
        %s133 = ssub.s32 %s20, 1
        // Predicated region
        $region13: #{tpu_custom_call.1} parent=11 // pred_check
          %p134 = pneg %p67
        $region14: #{tpu_custom_call.1} parent=11 // pred_check_branch
          %136 = sbr.rel (%p134) target = $region16
        $region15: #{tpu_custom_call.1} parent=11 // pred_region
          %138 = vsyncadd [#allocation6], 0
          %s139 = sshll.u32 %s1, 4
          %s140 = int_to_ptr.hbm [resolvable:$true] %s139
          %s141 = sshll.u32 [#allocation5], 4
          %s142 = int_to_ptr.vmem [resolvable:$true] %s141
          %147 = dma.hbm_to_vmem [thread:$0]  %s140, 192, %s142, [#allocation6], 64, 64, 4
        $region16: #{tpu_custom_call.1} parent=11 // pred_fallthru
          _
      $region12: #{tpu_custom_call.1} parent=5 // pred_fallthru
        _
      %p148 = scmp.lt.s32.totalorder %s20, 2
      // Predicated region
      $region17: #{tpu_custom_call.1} parent=5 // pred_check
        %p149 = pneg %p148
      $region18: #{tpu_custom_call.1} parent=5 // pred_check_branch
        %151 = sbr.rel (%p149) target = $region20
      $region19: #{tpu_custom_call.1} parent=5 // pred_region
        // Predicated region
        $region21: #{tpu_custom_call.1} parent=19 // pred_check
          %p152 = pneg %p40
        $region22: #{tpu_custom_call.1} parent=19 // pred_check_branch
          %154 = sbr.rel (%p152) target = $region24
        $region23: #{tpu_custom_call.1} parent=19 // pred_region
          %s155 = sand.u32 %s30, 1
          %s156 = scalar_lea.sflag [#allocation3], %s155
          %s157 = sand.u32 %s30, 1
          %s158 = smul.addr %s157, 4
          %s159 = scalar_lea.vmem [#allocation2], %s158
          %161 = vsyncadd %s156, 0
          %s162 = smul.addr %s20, 4
          %s163 = scalar_lea.hbm %s0, %s162
          %s165 = sshll.u32 %s163, 4
          %s166 = int_to_ptr.hbm [resolvable:$true] %s165
          %s167 = sshll.u32 %s159, 4
          %s168 = int_to_ptr.vmem [resolvable:$true] %s167
          %170 = dma.hbm_to_vmem [thread:$0]  %s166, 64, %s168, %s156
        $region24: #{tpu_custom_call.1} parent=19 // pred_fallthru
          _
      $region20: #{tpu_custom_call.1} parent=5 // pred_fallthru
        _
      %p171 = scmp.le.s32.totalorder 1, %s20
      %p172 = scmp.lt.s32.totalorder %s20, 3
      %p173 = pnand %p171, %p172
      %p174 = pneg %p173
      // Predicated region
      $region25: #{tpu_custom_call.1} parent=5 // pred_check
        _
      $region26: #{tpu_custom_call.1} parent=5 // pred_check_branch
        %176 = sbr.rel (%p173) target = $region28
      $region27: #{tpu_custom_call.1} parent=5 // pred_region
        %s177 = ssub.s32 %s20, 1
        %s178 = sand.u32 %s33, 1
        %s179 = scalar_lea.sflag [#allocation3], %s178
        %s180 = sand.u32 %s33, 1
        %s181 = smul.addr %s180, 4
        %s182 = scalar_lea.vmem [#allocation2], %s181
        // Predicated region
        $region29: #{tpu_custom_call.1} parent=27 // pred_check
          %p183 = pneg %p46
        $region30: #{tpu_custom_call.1} parent=27 // pred_check_branch
          %185 = sbr.rel (%p183) target = $region32
        $region31: #{tpu_custom_call.1} parent=27 // pred_region
          %187 = dma.done %s179, 64
        $region32: #{tpu_custom_call.1} parent=27 // pred_fallthru
          _
        // Predicated region
        $region33: #{tpu_custom_call.1} parent=27 // pred_check
          %p188 = pneg %p67
        $region34: #{tpu_custom_call.1} parent=27 // pred_check_branch
          %190 = sbr.rel (%p188) target = $region36
        $region35: #{tpu_custom_call.1} parent=27 // pred_region
          %192 = dma.done [#allocation6], 192
        $region36: #{tpu_custom_call.1} parent=27 // pred_fallthru
          _
        %s193 = sand.u32 %s33, 1
        %s194 = scalar_lea.sflag [#allocation3], %s193
        %s195 = sand.u32 %s33, 1
        %s196 = smul.addr %s195, 4
        %s197 = scalar_lea.vmem [#allocation2], %s196
        %p198 = pneg %p46
        %p199 = pneg %p43
        %p200 = pneg %p67
        %p201 = pneg %p64
        %p202 = pneg %p93
        %p203 = pneg %p90
        %s204 = sand.u32 %s80, 1
        %s205 = scalar_lea.sflag [#allocation4], %s204
        %s206 = sand.u32 %s80, 1
        %s207 = smul.addr %s206, 4
        %s208 = scalar_lea.vmem [#allocation7], %s207
        %p209 = pneg %p119
        %p210 = pneg %p116
        %s211 = sand.u32 %s106, 1
        %s212 = scalar_lea.sflag [#allocation9], %s211
        %s213 = sand.u32 %s106, 1
        %s214 = smul.addr %s213, 4
        %s215 = scalar_lea.vmem [#allocation8], %s214
        %v216 = vlaneseq
        %v217 = vand.u32 %v216, 127
        %vm218 = vcmp.eq.s32.totalorder %v217, 0
        %vm219 = vcmp.eq.s32.totalorder %v217, 15
        %v220 = vld [vmem:[#allocation5] sm:$0xf]
        %s221 = scalar_lea.vmem [#allocation5], 4
        %v222 = vld [vmem:[%s221] sm:$0xf]
        %s223 = scalar_lea.vmem [#allocation5], 8
        %v224 = vld [vmem:[%s223] sm:$0xf]
        %v225 = vld [vmem:[%s182] sm:$0xf]
        %vm226 = vcmask 1047680
        %227 = vrot.lane.b32.xlu0 %v225, 16
        %v228 = vpop.permute.xlu0 %227
        %v229 = vsel %vm226, %v228, %v225
        %230 = vrot.lane.b32.xlu0 %v229, 16
        %v231 = vpop.permute.xlu0 %230
        %v232 = vsel %vm226, %v231, %v225
        %234 = vrot.lane.b32.xlu0 %v232, 113
        %v235 = vpop.permute.xlu0 %234
        %v237 = vsel %vm218, 0.0, %v235
        %238 = vrot.lane.b32.xlu0 %v232, 127
        %v239 = vpop.permute.xlu0 %238
        %v241 = vsel %vm219, 0.0, %v239
        %vm242 = vcmask 31744
        %v244 = vsel %vm242, %v222, 0
        %vm246 = vcmask 1043456
        %v248 = vsel %vm246, %v225, 0
        %250 = vmatpush.msra.mxu0 0.0
        %251 = vmatpush.msra.mxu0 0.0
        %252 = vmatpush.msra.mxu0 0.0
        %253 = vmatpush.msra.mxu0 0.0
        %254 = vmatpush.msra.mxu0 0.0
        %255 = vmatpush.msra.mxu0 0.0
        %256 = vmatpush.msra.mxu0 0.0
        %257 = vmatpush.msra.mxu0 0.0
        %258 = vmatpush.msra.mxu0 0.0
        %259 = vmatpush.msra.mxu0 0.0
        %260 = vmatpush.msra.mxu0 0.0
        %261 = vmatpush.msra.mxu0 0.0
        %262 = vmatpush.msra.mxu0 0.0
        %263 = vmatpush.msra.mxu0 0.0
        %264 = vmatpush.msra.mxu0 0.0
        %265 = vmatpush.msra.mxu0 %v248
        %266 = vmatmul.f32.gmra.mxu0 %v244
        %v267 = vpop.f32.mrf.mxu0
        %v268 = vadd.f32 0.0, %v267
        %269 = vdwg.mxu0
        %v271 = vsel %vm242, %v220, 0
        %v274 = vsel %vm246, %v237, 0
        %276 = vmatpush.msra.mxu0 0.0
        %277 = vmatpush.msra.mxu0 0.0
        %278 = vmatpush.msra.mxu0 0.0
        %279 = vmatpush.msra.mxu0 0.0
        %280 = vmatpush.msra.mxu0 0.0
        %281 = vmatpush.msra.mxu0 0.0
        %282 = vmatpush.msra.mxu0 0.0
        %283 = vmatpush.msra.mxu0 0.0
        %284 = vmatpush.msra.mxu0 0.0
        %285 = vmatpush.msra.mxu0 0.0
        %286 = vmatpush.msra.mxu0 0.0
        %287 = vmatpush.msra.mxu0 0.0
        %288 = vmatpush.msra.mxu0 0.0
        %289 = vmatpush.msra.mxu0 0.0
        %290 = vmatpush.msra.mxu0 0.0
        %291 = vmatpush.msra.mxu0 %v274
        %292 = vmatmul.f32.gmra.mxu0 %v271
        %v293 = vpop.f32.mrf.mxu0
        %v294 = vadd.f32 %v268, %v293
        %295 = vdwg.mxu0
        %v297 = vsel %vm242, %v224, 0
        %v300 = vsel %vm246, %v241, 0
        %302 = vmatpush.msra.mxu0 0.0
        %303 = vmatpush.msra.mxu0 0.0
        %304 = vmatpush.msra.mxu0 0.0
        %305 = vmatpush.msra.mxu0 0.0
        %306 = vmatpush.msra.mxu0 0.0
        %307 = vmatpush.msra.mxu0 0.0
        %308 = vmatpush.msra.mxu0 0.0
        %309 = vmatpush.msra.mxu0 0.0
        %310 = vmatpush.msra.mxu0 0.0
        %311 = vmatpush.msra.mxu0 0.0
        %312 = vmatpush.msra.mxu0 0.0
        %313 = vmatpush.msra.mxu0 0.0
        %314 = vmatpush.msra.mxu0 0.0
        %315 = vmatpush.msra.mxu0 0.0
        %316 = vmatpush.msra.mxu0 0.0
        %317 = vmatpush.msra.mxu0 %v300
        %318 = vmatmul.f32.gmra.mxu0 %v297
        %v319 = vpop.f32.mrf.mxu0
        %v320 = vadd.f32 0.0, %v319
        %321 = vdwg.mxu0
        %v322 = vadd.f32 %v294, %v320
        %v323 = vxor.u32 %v322, 2147483648
        %v324 = vmul.f32 %v323, 1.442695
        %v325 = vpow.pop %v324
        %v326 = vadd.f32 %v325, 1.0
        %v327 = vrcp.pop %v326
        %v328 = vmul.f32 %v326, %v327
        %v329 = vsub.f32 1.0, %v328
        %v330 = vmul.f32 %v327, %v329
        %v331 = vadd.f32 %v327, %v330
        %vm332 = vweird.f32 %v326
        %vm333 = vweird.f32 %v327
        %vm334 = vmor %vm332, %vm333
        %v335 = vsel %vm334, %v327, %v331
        %v336 = vand.u32 2147483647, %v326
        %vm337 = vcmp.eq.f32.partialorder %v336, 8.507059e+37
        %v338 = vand.u32 %v326, 2147483648
        %v339 = vor.u32 1.1754944e-38, %v338
        %v340 = vsel %vm337, %v339, %v335
        %v341 = vmul.f32 1.0, %v340
        %v342 = vmul.f32 %v225, %v341
        %vm343 = vcmask 125952
        %344 = vst.msk [vmem:[%s208] sm:$0xf] %vm343, %v342
        %345 = vst.msk [vmem:[%s215] sm:$0xf] %vm343, %v341
        %s346 = sand.u32 %s80, 1
        %s347 = scalar_lea.sflag [#allocation4], %s346
        %s348 = sand.u32 %s80, 1
        %s349 = smul.addr %s348, 4
        %s350 = scalar_lea.vmem [#allocation7], %s349
        %s351 = sand.u32 %s106, 1
        %s352 = scalar_lea.sflag [#allocation9], %s351
        %s353 = sand.u32 %s106, 1
        %s354 = smul.addr %s353, 4
        %s355 = scalar_lea.vmem [#allocation8], %s354
        // Predicated region
        $region37: #{tpu_custom_call.1} parent=27 // pred_check
          %p356 = pneg %p90
        $region38: #{tpu_custom_call.1} parent=27 // pred_check_branch
          %358 = sbr.rel (%p356) target = $region40
        $region39: #{tpu_custom_call.1} parent=27 // pred_region
          %360 = vsyncadd %s347, 0
          %s361 = smul.addr %s25, 4
          %s362 = scalar_lea.hbm %s2, %s361
          %s364 = sshll.u32 %s350, 4
          %s365 = int_to_ptr.vmem [resolvable:$true] %s364
          %s366 = sshll.u32 %s362, 4
          %s367 = int_to_ptr.hbm [resolvable:$true] %s366
          %369 = dma.vmem_to_hbm [thread:$0]  %s365, 64, %s367, %s347
        $region40: #{tpu_custom_call.1} parent=27 // pred_fallthru
          _
        // Predicated region
        $region41: #{tpu_custom_call.1} parent=27 // pred_check
          %p370 = pneg %p116
        $region42: #{tpu_custom_call.1} parent=27 // pred_check_branch
          %372 = sbr.rel (%p370) target = $region44
        $region43: #{tpu_custom_call.1} parent=27 // pred_region
          %374 = vsyncadd %s352, 0
          %s375 = smul.addr %s25, 4
          %s376 = scalar_lea.hbm %s3, %s375
          %s378 = sshll.u32 %s355, 4
          %s379 = int_to_ptr.vmem [resolvable:$true] %s378
          %s380 = sshll.u32 %s376, 4
          %s381 = int_to_ptr.hbm [resolvable:$true] %s380
          %383 = dma.vmem_to_hbm [thread:$0]  %s379, 64, %s381, %s352
        $region44: #{tpu_custom_call.1} parent=27 // pred_fallthru
          _
      $region28: #{tpu_custom_call.1} parent=5 // pred_fallthru
        _
      %p384 = scmp.le.s32.totalorder 2, %s20
      // Predicated region
      $region45: #{tpu_custom_call.1} parent=5 // pred_check
        %p385 = pneg %p384
      $region46: #{tpu_custom_call.1} parent=5 // pred_check_branch
        %387 = sbr.rel (%p385) target = $region48
      $region47: #{tpu_custom_call.1} parent=5 // pred_region
        %s388 = ssub.s32 %s20, 2
        // Predicated region
        $region49: #{tpu_custom_call.1} parent=47 // pred_check
          %p389 = pneg %p96
        $region50: #{tpu_custom_call.1} parent=47 // pred_check_branch
          %391 = sbr.rel (%p389) target = $region52
        $region51: #{tpu_custom_call.1} parent=47 // pred_region
          %s392 = sand.u32 %s81, 1
          %s393 = scalar_lea.sflag [#allocation4], %s392
          %s394 = sand.u32 %s81, 1
          %s395 = smul.addr %s394, 4
          %s396 = scalar_lea.vmem [#allocation7], %s395
          %398 = dma.done %s393, 64
        $region52: #{tpu_custom_call.1} parent=47 // pred_fallthru
          _
        // Predicated region
        $region53: #{tpu_custom_call.1} parent=47 // pred_check
          %p399 = pneg %p122
        $region54: #{tpu_custom_call.1} parent=47 // pred_check_branch
          %401 = sbr.rel (%p399) target = $region56
        $region55: #{tpu_custom_call.1} parent=47 // pred_region
          %s402 = sand.u32 %s107, 1
          %s403 = scalar_lea.sflag [#allocation9], %s402
          %s404 = sand.u32 %s107, 1
          %s405 = smul.addr %s404, 4
          %s406 = scalar_lea.vmem [#allocation8], %s405
          %408 = dma.done %s403, 64
        $region56: #{tpu_custom_call.1} parent=47 // pred_fallthru
          _
      $region48: #{tpu_custom_call.1} parent=5 // pred_fallthru
        _
    $region6: #{tpu_custom_call.1} parent=1 // loop_footer
      %s24 = sadd.s32 1, %s20
    $region7: #{tpu_custom_call.1} parent=1 // loop_footer_branch
      %19 = sbr.rel target = $region3
    $region8: #{tpu_custom_call.1} parent=1 // loop_exit
      _
    %409 = vsyncpa [#allocation3], 1
    %s410 = scalar_lea.sflag [#allocation3], 1
    %411 = vsyncpa %s410, 1
    %412 = vsyncpa [#allocation6], 1
    %413 = vsyncpa [#allocation4], 1
    %s414 = scalar_lea.sflag [#allocation4], 1
    %415 = vsyncpa %s414, 1
    %416 = vsyncpa [#allocation9], 1
    %s417 = scalar_lea.sflag [#allocation9], 1
    %418 = vsyncpa %s417, 1

</llo_original>
